<compile_context>
chip_gen: v7x
topology: tpu7x:2x2x1
jax: 0.10.0
libtpu: 0.0.40
codegen_flags: <defaults>
</compile_context>

<pallas_src>
import jax
import jax.numpy as jnp
from jax.experimental import pallas as pl
from jax.experimental.pallas import tpu as pltpu


def _cdiv(a, b):
    return -(-a // b)


def _l2norm_kernel(alpha_ref, x_ref, o_ref):
    # x_ref block: (Nb, C, t_hw)
    x = x_ref[...]
    xf = x.astype(jnp.float32)
    # f32 sum of squares over the channel (sublane) axis, keepdim -> (Nb, 1, t_hw)
    sq_sum = jnp.sum(xf * xf, axis=1, keepdims=True)
    # rsqrt goes to the EUP; fold alpha into the scale once.
    scale = alpha_ref[0] * jax.lax.rsqrt(sq_sum)
    # Multiply in f32, single cast on store (precision + no bf16 VALU emulation on v5e).
    o_ref[...] = (xf * scale).astype(o_ref.dtype)


def _choose_tiles(N, C, HW, itemsize, tile_budget_bytes):
    """Pick (Nb, t_hw) so per-step traffic is multi-MiB but fits the VMEM budget."""
    hw_full = _cdiv(HW, 128) * 128

    # VMEM cost per block ~ 2 buffers * (in + out) * block_bytes + f32 widen temp.
    factor = 4.0 + 4.0 / itemsize
    max_block_elems = max(int(tile_budget_bytes / (factor * itemsize)), 128 * C)

    # Lane tile: largest multiple of 128 that fits with Nb=1, capped for pipelining.
    t_hw = min(hw_full, 8192, max(128, (max_block_elems // C) // 128 * 128))

    # Batch blocking: target ~2 MiB per array per step when C*t_hw is small.
    target_elems = (2 * 1024 * 1024) // itemsize
    nb = max(1, min(N,
                    target_elems // max(C * t_hw, 1),
                    max_block_elems // max(C * t_hw, 1)))

    # Ensure >= 2 grid steps so v7x can shard across both TensorCores.
    if _cdiv(N, nb) * _cdiv(HW, t_hw) < 2:
        if nb > 1:
            nb = _cdiv(nb, 2)
        elif t_hw > 128 and _cdiv(HW, 128) >= 2:
            t_hw = _cdiv(_cdiv(HW, 2), 128) * 128
    return nb, t_hw


def l2norm_forward(x_nchw, alpha):
    """x_nchw: (N, C, H, W); alpha: (1,) float32 scalar parameter."""
    N, C, H, W = x_nchw.shape
    HW = H * W
    x3 = x_nchw.reshape(N, C, HW)
    itemsize = jnp.dtype(x_nchw.dtype).itemsize

    # Generation-aware VMEM sizing (v7x: 64 MiB/TC, v5e/v6e: 128 MiB).
    try:
        vmem_cap = int(pltpu.get_tpu_info().vmem_capacity_bytes)
    except Exception:
        vmem_cap = 64 * 1024 * 1024  # conservative fallback (v7x per-TC VMEM)
    vmem_limit = min(vmem_cap, max(32 * 1024 * 1024, int(vmem_cap * 0.55)))
    tile_budget = int(vmem_limit * 0.6)

    nb, t_hw = _choose_tiles(N, C, HW, itemsize, tile_budget)
    grid = (_cdiv(N, nb), _cdiv(HW, t_hw))

    cost = pl.CostEstimate(
        flops=3 * N * C * HW,
        transcendentals=N * HW,
        bytes_accessed=2 * N * C * HW * itemsize,
    )

    out3 = pl.pallas_call(
        _l2norm_kernel,
        out_shape=jax.ShapeDtypeStruct((N, C, HW), x_nchw.dtype),
        grid_spec=pltpu.PrefetchScalarGridSpec(
            num_scalar_prefetch=0,
            grid=grid,
            in_specs=[
                pl.BlockSpec(memory_space=pltpu.SMEM),                  # alpha (1,)
                pl.BlockSpec((nb, C, t_hw), lambda n, h: (n, 0, h)),    # x tile
            ],
            out_specs=pl.BlockSpec((nb, C, t_hw), lambda n, h: (n, 0, h)),
        ),
        compiler_params=pltpu.CompilerParams(
            dimension_semantics=("parallel", "parallel"),
            vmem_limit_bytes=vmem_limit,
        ),
        cost_estimate=cost,
    )(alpha, x3)

    return out3.reshape(N, C, H, W)


if __name__ == "__main__":
    key = jax.random.PRNGKey(0)
    x = jax.random.normal(key, (2, 4, 16, 16), dtype=jnp.float32)

    # Parameter init (matches nn.Parameter(torch.FloatTensor([50.0])))
    alpha = jnp.array([50.0], dtype=jnp.float32)

    out = l2norm_forward(x, alpha)
    out = jax.block_until_ready(out)

    # Reference check in plain JAX
    ref = alpha[0] * (x / jnp.sqrt(jnp.sum(x * x, axis=1, keepdims=True)))
    assert out.shape == x.shape and out.dtype == x.dtype
    assert jnp.allclose(out, ref, rtol=1e-4, atol=1e-4)

    print("KERNEL_OK")
</pallas_src>

<mosaic_0001>
module attributes {stable_mosaic.version = 11 : i64} {
  func.func @_l2norm_kernel(%arg0: i32, %arg1: i32, %arg2: memref<1xf32, #tpu.memory_space<smem>>, %arg3: memref<1x4x256xf32, #tpu.memory_space<vmem>>, %arg4: memref<1x4x256xf32, #tpu.memory_space<vmem>>) attributes {dimension_semantics = [#tpu.dimension_semantics<parallel>, #tpu.dimension_semantics<parallel>], iteration_bounds = array<i64: 2, 1>, scalar_prefetch = 0 : i64, scratch_operands = 0 : i64, tpu.core_type = #tpu.core_type<tc>, window_params = [{transform_indices = @transform_0, window_bounds = array<i64: 1>}, {transform_indices = @transform_1, window_bounds = array<i64: 1, 4, 256>}, {transform_indices = @transform_2, window_bounds = array<i64: 1, 4, 256>}]} {
    %c0 = arith.constant 0 : index
    %c0_0 = arith.constant 0 : index
    %c0_1 = arith.constant 0 : index
    %0 = vector.load %arg3[%c0, %c0_0, %c0_1] : memref<1x4x256xf32, #tpu.memory_space<vmem>>, vector<1x4x256xf32>
    %1 = arith.mulf %0, %0 : vector<1x4x256xf32>
    %cst = arith.constant dense<0.000000e+00> : vector<1x256xf32>
    %2 = vector.multi_reduction <add>, %1, %cst [1] : vector<1x4x256xf32> to vector<1x256xf32>
    %3 = vector.shape_cast %2 : vector<1x256xf32> to vector<1x1x256xf32>
    %c0_2 = arith.constant 0 : index
    %4 = memref.load %arg2[%c0_2] : memref<1xf32, #tpu.memory_space<smem>>
    %5 = math.rsqrt %3 : vector<1x1x256xf32>
    %6 = vector.broadcast %4 : f32 to vector<1x1x256xf32>
    %7 = arith.mulf %6, %5 : vector<1x1x256xf32>
    %8 = vector.broadcast %7 : vector<1x1x256xf32> to vector<1x4x256xf32>
    %9 = arith.mulf %0, %8 : vector<1x4x256xf32>
    %c0_3 = arith.constant 0 : index
    %c0_4 = arith.constant 0 : index
    %c0_5 = arith.constant 0 : index
    %10 = vector.load %arg4[%c0_3, %c0_4, %c0_5] : memref<1x4x256xf32, #tpu.memory_space<vmem>>, vector<1x4x256xf32>
    tpu.vector_store %arg4[%c0_3, %c0_4, %c0_5], %9 {strides = array<i32>} : memref<1x4x256xf32, #tpu.memory_space<vmem>>, vector<1x4x256xf32>,
    return
  }
  func.func @transform_0(%arg0: i32, %arg1: i32) -> i32 {
    %c0_i32 = arith.constant 0 : i32
    %c0_i32_0 = arith.constant 0 : i32
    return %c0_i32 : i32
  }
  func.func @transform_1(%arg0: i32, %arg1: i32) -> (i32, i32, i32) {
    %c0_i32 = arith.constant 0 : i32
    %c0_i32_0 = arith.constant 0 : i32
    return %arg0, %c0_i32, %arg1 : i32, i32, i32
  }
  func.func @transform_2(%arg0: i32, %arg1: i32) -> (i32, i32, i32) {
    %c0_i32 = arith.constant 0 : i32
    %c0_i32_0 = arith.constant 0 : i32
    return %arg0, %c0_i32, %arg1 : i32, i32, i32
  }
}

</mosaic_0001>

<llo_original>
// kernel: tpu_custom_call.1
$region0: #{tpu_custom_call.1}
  #allocation0 [shape = 'u32[]', space=smem, size = 0x4, offset = 0x4, fixed_abs, tag = 'smem constant byte address 0x4 - core index']
  #allocation1 [shape = 'u32[144,128]{1,0:T(1,128)}', space=vmem, size = 0x12000, scoped, tag = 'internal scratch']
  #allocation2 [shape = 'f32[1]{0:T(128)S(6)}', space=smem, size = 0x200, scoped, tag = 'scoped memory for tpu_custom_call.1']
  %s0 = inlined_call_operand.<no memory space> [shape: f32[1], index: 0, kind: input, shape index: {}]
  %s1 = inlined_call_operand.hbm [shape: f32[2,4,256], index: 1, kind: input, shape index: {}]
  %s2 = inlined_call_operand.hbm [shape: f32[2,4,256], index: 2, kind: output, shape index: {}]
  %s3 = sld [smem:[#allocation0]]
  $region45: #{tpu_custom_call.1} parent=0
    _
  %s5 = ssub.s32 1, %s3
  %s6 = scalar_select 0, %s5, %s3
  %7 = sst [smem:[#allocation2]] %s0
  $region1: #{tpu_custom_call.1} parent=0
    #allocation3 [shape = 'u8[8192]{0}', space=vmem, size = 0x2000, scoped, tag = 'input window, operand 1']
    #allocation4 [shape = 's32[2]{0}', space=sflag, size = 0x8, scoped, tag = 'scoped memory for tpu_custom_call.1']
    #allocation5 [shape = 's32[2]{0}', space=sflag, size = 0x8, scoped, tag = 'scoped memory for tpu_custom_call.1']
    #allocation6 [shape = 'u8[8192]{0}', space=vmem, size = 0x2000, scoped, tag = 'output window, operand 0']
    %8 = vsyncpa [#allocation4], 0
    %s9 = scalar_lea.sflag [#allocation4], 1
    %10 = vsyncpa %s9, 0
    %11 = vsyncpa [#allocation5], 0
    %s12 = scalar_lea.sflag [#allocation5], 1
    %13 = vsyncpa %s12, 0
    loop: start=0, step=1, limit=4
    $region2: #{tpu_custom_call.1} parent=1 // loop_pre_header
      _
    $region3: #{tpu_custom_call.1} parent=1 // loop_header
      %s15 = sphi 0, %s19
      %p16 = scmp.ge.s32.totalorder %s15, 4
      %s22 = sphi 0, %s34
      %s23 = sphi 0, %s30
      %s24 = sphi 0, %s22
      %s25 = sphi 0, %s23
      %s26 = sphi 0, %s24
      %s27 = sphi 0, %s25
      %s35 = sphi 0, %s35
      %s37 = sphi 0, %s35
      %s38 = sphi 0, %s37
      %s52 = sphi 0, %s38
      %s60 = sphi 0, %s62
      %s63 = sphi 0, %s60
      %s64 = sphi 0, %s63
      %s80 = sphi 0, %s64
      %s88 = sphi 0, %s90
      %s91 = sphi 0, %s88
      %s92 = sphi 0, %s91
      %s108 = sphi 0, %s92
    $region4: #{tpu_custom_call.1} parent=1 // loop_header_branch
      %18 = sbr.rel (%p16) target = $region8
    $region5: #{tpu_custom_call.1} parent=1 // loop_body
      %s20 = ssub.s32 %s15, 1
      %s21 = ssub.s32 %s15, 2
      %s28 = sadd.s32 1, %s23
      %p29 = scmp.ge.s32.totalorder %s28, 1
      %s30 = scalar_select %p29, 0, %s28
      %s31 = sadd.s32 1, %s22
      %s32 = scalar_select %p29, %s31, %s22
      %p33 = scmp.ge.s32.totalorder %s32, 2
      %s34 = scalar_select %p33, 0, %s32
      %s36 = sadd.s32 %s35, 1
      %p39 = scmp.eq.s32.totalorder %s15, 1
      %p40 = scmp.ne.s32.totalorder %s35, %s37
      %p41 = scmp.eq.s32.totalorder %s15, 0
      %p42 = por %p40, %p41
      %p43 = scmp.ne.s32.totalorder %s35, %s37
      %p44 = scmp.eq.s32.totalorder %s20, 1
      %p45 = por %p43, %p44
      %p46 = scmp.ne.s32.totalorder %s37, %s38
      %p47 = scmp.eq.s32.totalorder %s20, 0
      %p48 = por %p46, %p47
      %p49 = scmp.ne.s32.totalorder %s37, %s38
      %p50 = scmp.eq.s32.totalorder %s21, 1
      %p51 = por %p49, %p50
      %p53 = scmp.ne.s32.totalorder %s38, %s52
      %p54 = scmp.eq.s32.totalorder %s21, 0
      %p55 = por %p53, %p54
      %s56 = ssub.s32 %s22, %s34
      %s57 = ssub.s32 %s23, %s30
      %s58 = sor.u32 %s56, %s57
      %p59 = scmp.eq.s32.totalorder %s58, 0
      %s61 = sadd.s32 %s60, 1
      %s62 = scalar_select %p59, %s60, %s61
      %p65 = pneg %p59
      %p66 = scmp.eq.s32.totalorder %s15, 1
      %p67 = por %p65, %p66
      %p68 = scmp.ne.s32.totalorder %s60, %s63
      %p69 = scmp.eq.s32.totalorder %s15, 0
      %p70 = por %p68, %p69
      %p71 = scmp.ne.s32.totalorder %s60, %s63
      %p72 = scmp.eq.s32.totalorder %s20, 1
      %p73 = por %p71, %p72
      %p74 = scmp.ne.s32.totalorder %s63, %s64
      %p75 = scmp.eq.s32.totalorder %s20, 0
      %p76 = por %p74, %p75
      %p77 = scmp.ne.s32.totalorder %s63, %s64
      %p78 = scmp.eq.s32.totalorder %s21, 1
      %p79 = por %p77, %p78
      %p81 = scmp.ne.s32.totalorder %s64, %s80
      %p82 = scmp.eq.s32.totalorder %s21, 0
      %p83 = por %p81, %p82
      %s84 = ssub.s32 %s22, %s34
      %s85 = ssub.s32 %s23, %s30
      %s86 = sor.u32 %s84, %s85
      %p87 = scmp.eq.s32.totalorder %s86, 0
      %s89 = sadd.s32 %s88, 1
      %s90 = scalar_select %p87, %s88, %s89
      %p93 = pneg %p87
      %p94 = scmp.eq.s32.totalorder %s15, 1
      %p95 = por %p93, %p94
      %p96 = scmp.ne.s32.totalorder %s88, %s91
      %p97 = scmp.eq.s32.totalorder %s15, 0
      %p98 = por %p96, %p97
      %p99 = scmp.ne.s32.totalorder %s88, %s91
      %p100 = scmp.eq.s32.totalorder %s20, 1
      %p101 = por %p99, %p100
      %p102 = scmp.ne.s32.totalorder %s91, %s92
      %p103 = scmp.eq.s32.totalorder %s20, 0
      %p104 = por %p102, %p103
      %p105 = scmp.ne.s32.totalorder %s91, %s92
      %p106 = scmp.eq.s32.totalorder %s21, 1
      %p107 = por %p105, %p106
      %p109 = scmp.ne.s32.totalorder %s92, %s108
      %p110 = scmp.eq.s32.totalorder %s21, 0
      %p111 = por %p109, %p110
      %p112 = scmp.le.s32.totalorder 1, %s15
      %p113 = scmp.lt.s32.totalorder %s15, 3
      %p114 = pnand %p112, %p113
      %p115 = pneg %p114
      // Predicated region
      $region9: #{tpu_custom_call.1} parent=5 // pred_check
        _
      $region10: #{tpu_custom_call.1} parent=5 // pred_check_branch
        %117 = sbr.rel (%p114) target = $region12
      $region11: #{tpu_custom_call.1} parent=5 // pred_region
        %s118 = ssub.s32 %s15, 1
        // Predicated region
        $region13: #{tpu_custom_call.1} parent=11 // pred_check
          %p119 = pneg %p48
        $region14: #{tpu_custom_call.1} parent=11 // pred_check_branch
          %121 = sbr.rel (%p119) target = $region16
        $region15: #{tpu_custom_call.1} parent=11 // pred_region
          _
        $region16: #{tpu_custom_call.1} parent=11 // pred_fallthru
          _
      $region12: #{tpu_custom_call.1} parent=5 // pred_fallthru
        _
      %p122 = scmp.lt.s32.totalorder %s15, 2
      // Predicated region
      $region17: #{tpu_custom_call.1} parent=5 // pred_check
        %p123 = pneg %p122
      $region18: #{tpu_custom_call.1} parent=5 // pred_check_branch
        %125 = sbr.rel (%p123) target = $region20
      $region19: #{tpu_custom_call.1} parent=5 // pred_region
        // Predicated region
        $region21: #{tpu_custom_call.1} parent=19 // pred_check
          %p126 = pneg %p70
        $region22: #{tpu_custom_call.1} parent=19 // pred_check_branch
          %128 = sbr.rel (%p126) target = $region24
        $region23: #{tpu_custom_call.1} parent=19 // pred_region
          %s129 = sand.u32 %s60, 1
          %s130 = scalar_lea.sflag [#allocation4], %s129
          %s131 = sand.u32 %s60, 1
          %s132 = smul.addr %s131, 8
          %s133 = scalar_lea.vmem [#allocation3], %s132
          %s134 = smul.u32 2, %s23
          %s136 = ssub.s32 128, 128
          %137 = vsyncadd %s130, %s136
          %s138 = smul.addr %s22, 2
          %s139 = sadd.s32 %s134, %s138
          %s140 = smul.addr %s139, 64
          %s141 = scalar_lea.hbm %s1, %s140
          %s143 = sshll.u32 %s133, 4
          %s144 = int_to_ptr.vmem [resolvable:$true] %s143
          %146 = dma.hbm_to_vmem [thread:$0]  %s141, 128, %s144, %s130
        $region24: #{tpu_custom_call.1} parent=19 // pred_fallthru
          _
      $region20: #{tpu_custom_call.1} parent=5 // pred_fallthru
        _
      %p147 = scmp.le.s32.totalorder 1, %s15
      %p148 = scmp.lt.s32.totalorder %s15, 3
      %p149 = pnand %p147, %p148
      %p150 = pneg %p149
      // Predicated region
      $region25: #{tpu_custom_call.1} parent=5 // pred_check
        _
      $region26: #{tpu_custom_call.1} parent=5 // pred_check_branch
        %152 = sbr.rel (%p149) target = $region28
      $region27: #{tpu_custom_call.1} parent=5 // pred_region
        %s153 = ssub.s32 %s15, 1
        %s154 = sand.u32 %s63, 1
        %s155 = scalar_lea.sflag [#allocation4], %s154
        %s156 = sand.u32 %s63, 1
        %s157 = smul.addr %s156, 8
        %s158 = scalar_lea.vmem [#allocation3], %s157
        // Predicated region
        $region29: #{tpu_custom_call.1} parent=27 // pred_check
          %p159 = pneg %p76
        $region30: #{tpu_custom_call.1} parent=27 // pred_check_branch
          %161 = sbr.rel (%p159) target = $region32
        $region31: #{tpu_custom_call.1} parent=27 // pred_region
          %162 = dma.done %s155, 128
        $region32: #{tpu_custom_call.1} parent=27 // pred_fallthru
          _
        %p163 = pneg %p48
        %p164 = pneg %p45
        %s165 = sand.u32 %s63, 1
        %s166 = scalar_lea.sflag [#allocation4], %s165
        %s167 = sand.u32 %s63, 1
        %s168 = smul.addr %s167, 8
        %s169 = scalar_lea.vmem [#allocation3], %s168
        %p170 = pneg %p76
        %p171 = pneg %p73
        %p172 = pneg %p104
        %p173 = pneg %p101
        %s174 = sand.u32 %s91, 1
        %s175 = scalar_lea.sflag [#allocation5], %s174
        %s176 = sand.u32 %s91, 1
        %s177 = smul.addr %s176, 8
        %s178 = scalar_lea.vmem [#allocation6], %s177
        %s179 = smul.u32 2, %s25
        %s180 = smul.u32 2, %s25
        %v181 = vld [vmem:[%s158] sm:$0xff]
        %v182 = vmul.f32 %v181, %v181
        %v184 = vcombine.high %v182, %v182
        %vm186 = vcmask 1043456
        %v187 = vsel %vm186, %v182, 0.0
        %v188 = vrot.slane %v187, 4
        %v189 = vadd.f32 %v187, %v188
        %v190 = vrot.slane %v189, 2
        %v191 = vadd.f32 %v189, %v190
        %v192 = vrot.slane %v191, 1
        %v193 = vadd.f32 %v191, %v192
        %v194 = vsel %vm186, %v184, 0.0
        %v195 = vrot.slane %v194, 4
        %v196 = vadd.f32 %v194, %v195
        %v197 = vrot.slane %v196, 2
        %v198 = vadd.f32 %v196, %v197
        %v199 = vrot.slane %v198, 1
        %v200 = vadd.f32 %v198, %v199
        %s201 = sld [smem:[#allocation2]]
        %v202 = vrsqrt.pop %v193
        %v203 = vrsqrt.pop %v200
        %v204 = vstv %s201
        %v205 = vmul.f32 %v204, %v202
        %v206 = vmul.f32 %v204, %v203
        %v209 = vcombine.low %v205, %v206
        %v211 = vmul.f32 %v181, %v209
        %212 = vst [vmem:[%s178] sm:$0xff] %v211
        %s213 = sand.u32 %s91, 1
        %s214 = scalar_lea.sflag [#allocation5], %s213
        %s215 = sand.u32 %s91, 1
        %s216 = smul.addr %s215, 8
        %s217 = scalar_lea.vmem [#allocation6], %s216
        // Predicated region
        $region33: #{tpu_custom_call.1} parent=27 // pred_check
          %p218 = pneg %p101
        $region34: #{tpu_custom_call.1} parent=27 // pred_check_branch
          %220 = sbr.rel (%p218) target = $region36
        $region35: #{tpu_custom_call.1} parent=27 // pred_region
          %s221 = smul.u32 2, %s25
          %s223 = ssub.s32 128, 128
          %224 = vsyncadd %s214, %s223
          %s225 = smul.addr %s24, 2
          %s226 = sadd.s32 %s221, %s225
          %s227 = smul.addr %s226, 64
          %s228 = scalar_lea.hbm %s2, %s227
          %s230 = sshll.u32 %s217, 4
          %s231 = int_to_ptr.vmem [resolvable:$true] %s230
          %233 = dma.vmem_to_hbm [thread:$0]  %s231, 128, %s228, %s214
        $region36: #{tpu_custom_call.1} parent=27 // pred_fallthru
          _
      $region28: #{tpu_custom_call.1} parent=5 // pred_fallthru
        _
      %p234 = scmp.le.s32.totalorder 2, %s15
      // Predicated region
      $region37: #{tpu_custom_call.1} parent=5 // pred_check
        %p235 = pneg %p234
      $region38: #{tpu_custom_call.1} parent=5 // pred_check_branch
        %237 = sbr.rel (%p235) target = $region40
      $region39: #{tpu_custom_call.1} parent=5 // pred_region
        %s238 = ssub.s32 %s15, 2
        // Predicated region
        $region41: #{tpu_custom_call.1} parent=39 // pred_check
          %p239 = pneg %p107
        $region42: #{tpu_custom_call.1} parent=39 // pred_check_branch
          %241 = sbr.rel (%p239) target = $region44
        $region43: #{tpu_custom_call.1} parent=39 // pred_region
          %s242 = sand.u32 %s92, 1
          %s243 = scalar_lea.sflag [#allocation5], %s242
          %s244 = sand.u32 %s92, 1
          %s245 = smul.addr %s244, 8
          %s246 = scalar_lea.vmem [#allocation6], %s245
          %247 = dma.done %s243, 128
        $region44: #{tpu_custom_call.1} parent=39 // pred_fallthru
          _
      $region40: #{tpu_custom_call.1} parent=5 // pred_fallthru
        _
    $region6: #{tpu_custom_call.1} parent=1 // loop_footer
      %s19 = sadd.s32 1, %s15
    $region7: #{tpu_custom_call.1} parent=1 // loop_footer_branch
      %14 = sbr.rel target = $region3
    $region8: #{tpu_custom_call.1} parent=1 // loop_exit
      _
    %248 = vsyncpa [#allocation4], 1
    %s249 = scalar_lea.sflag [#allocation4], 1
    %250 = vsyncpa %s249, 1
    %251 = vsyncpa [#allocation5], 1
    %s252 = scalar_lea.sflag [#allocation5], 1
    %253 = vsyncpa %s252, 1

</llo_original>
